<compile_context>
chip_gen: v5e
topology: v5e:2x2
jax: 0.10.0
libtpu: 0.0.40
codegen_flags: <defaults>
</compile_context>

<pallas_src>
import functools

import jax
import jax.numpy as jnp
from jax.experimental import pallas as pl
from jax.experimental.pallas import tpu as pltpu


def _round_up(v, m):
    return -(-v // m) * m


def _default_act_dtype():
    """bf16 elementwise chain on chips with bf16 VPU/EUP (v6e/v7x), else f32."""
    try:
        kind = jax.devices()[0].device_kind.lower()
    except Exception:
        return jnp.float32
    if any(tok in kind for tok in ("v6", "v7", "tpu7", "7x")):
        return jnp.bfloat16
    return jnp.float32


def _pick_batch_tile(batch, block_b):
    """Pick (TB, Bp): TB % 16 == 0 always; TB % 128 == 0 whenever there is more
    than one tile (lane-dense transposed output blocks); TB >= 256 and >= 2
    parallel tiles whenever the batch allows (MXU M fill + both v7x cores)."""
    b16 = _round_up(max(batch, 1), 16)
    if b16 <= 128:
        return b16, b16                       # tiny batch: one small tile
    tb = min(_round_up(block_b, 128), _round_up(b16, 128))
    tb = max(tb, 128)
    if _round_up(b16, tb) == tb:              # would be a single tile
        tb = max(128, _round_up(-(-b16 // 2), 128))   # split for v7x's 2 TCs
    return tb, _round_up(b16, tb)


def lstm_fc_kernel(x_ref, w1_ref, b1_ref, w2_ref, b2_ref, wfc_ref, bfc_ref,
                   out_ref, *, hidden_size, act_dtype):
    H = hidden_size

    def sigmoid(v):
        # 0.5 * tanh(0.5 * v) + 0.5 == sigmoid(v): 1 EUP op, no exp + divide.
        return jnp.tanh(v * 0.5) * 0.5 + 0.5

    def cell(inp, w_ref, b_ref):
        # bf16 MXU operands, f32 accumulation. Gate columns are [i | g | o];
        # the forget gate is dead against c0 == 0 and was dropped upstream.
        g = jnp.dot(inp.astype(jnp.bfloat16), w_ref[...],
                    preferred_element_type=jnp.float32) + b_ref[...]
        g = g.astype(act_dtype)              # bf16 VPU/EUP chain on v6e/v7x
        i = sigmoid(g[:, 0 * H:1 * H])
        gg = jnp.tanh(g[:, 1 * H:2 * H])
        o = sigmoid(g[:, 2 * H:3 * H])
        return o * jnp.tanh(i * gg)          # f * c0 vanishes (zero init state)

    h1 = cell(x_ref[...], w1_ref, b1_ref)    # LSTM layer 0, t = 0
    h2 = cell(h1, w2_ref, b2_ref)            # LSTM layer 1, t = 0 (== h_n[-1])

    # fc: Linear(H, 1).  Weight the hidden state (VPU), transpose so the TB
    # per-row scalars land along lanes (XLU has slack), sublane-reduce in f32,
    # and store a single lane-dense (1, TB) block -- no 128x-redundant
    # broadcast writeback.
    h2w = (h2 * wfc_ref[...]).astype(jnp.float32)            # (TB, H) f32
    y = jnp.sum(jnp.transpose(h2w), axis=0, keepdims=True)   # (1, TB) f32
    out_ref[...] = y + bfc_ref[0, 0]


def lstm_forward(x, params, hidden_size, *, block_b=512, act_dtype=None):
    """x: (B, input_size) f32 or bf16 -> (B, 1) f32, one fused pallas_call.

    Only valid for the module's forward: seq_len == 1 (x.unsqueeze(1)) with the
    default zero initial (h0, c0)."""
    w1, b1, w2, b2, wfc, bfc = params
    B, In = x.shape
    H = hidden_size
    if act_dtype is None:
        act_dtype = _default_act_dtype()

    TB, Bp = _pick_batch_tile(B, block_b)
    if Bp != B:
        x = jnp.pad(x, ((0, Bp - B), (0, 0)))
    num_tiles = Bp // TB

    const = lambda b: (0, 0)   # weights stay VMEM-resident across the grid
    out = pl.pallas_call(
        functools.partial(lstm_fc_kernel, hidden_size=H, act_dtype=act_dtype),
        out_shape=jax.ShapeDtypeStruct((1, Bp), jnp.float32),
        grid=(num_tiles,),
        in_specs=[
            pl.BlockSpec((TB, In), lambda b: (b, 0)),           # x: blocked batch
            pl.BlockSpec((In, 3 * H), const),                   # w1 (bf16, [i|g|o])
            pl.BlockSpec((1, 3 * H), const),                    # b1 (f32)
            pl.BlockSpec((H, 3 * H), const),                    # w2 (bf16, [i|g|o])
            pl.BlockSpec((1, 3 * H), const),                    # b2 (f32)
            pl.BlockSpec((1, H), const),                        # wfc row vector (f32)
            pl.BlockSpec(memory_space=pltpu.MemorySpace.SMEM),  # bfc scalar (1,1)
        ],
        # Lane-dense output: tile b owns lanes [b*TB, (b+1)*TB) of a (1, Bp) row.
        out_specs=pl.BlockSpec((1, TB), lambda b: (0, b)),
        compiler_params=pltpu.CompilerParams(
            dimension_semantics=("parallel",)),   # shard batch tiles (2 TCs on v7x)
    )(x, w1, b1, w2, b2, wfc, bfc)
    return out[0, :B].reshape(B, 1)


def init_params(key, input_size, hidden_size):
    """Synthetic parameters with nn.LSTM / nn.Linear shapes, pre-packed for the kernel."""
    H, In = hidden_size, input_size
    ks = jax.random.split(key, 8)
    # PyTorch layouts: weight_ih_l{k}: (4H, in), biases: (4H,), gate order [i|f|g|o].
    w_ih_l0 = jax.random.normal(ks[0], (4 * H, In), jnp.float32) * 0.05
    b_ih_l0 = jax.random.normal(ks[1], (4 * H,), jnp.float32) * 0.05
    b_hh_l0 = jax.random.normal(ks[2], (4 * H,), jnp.float32) * 0.05
    w_ih_l1 = jax.random.normal(ks[3], (4 * H, H), jnp.float32) * 0.05
    b_ih_l1 = jax.random.normal(ks[4], (4 * H,), jnp.float32) * 0.05
    b_hh_l1 = jax.random.normal(ks[5], (4 * H,), jnp.float32) * 0.05
    w_fc = jax.random.normal(ks[6], (1, H), jnp.float32) * 0.05
    b_fc = jax.random.normal(ks[7], (1,), jnp.float32) * 0.05
    # weight_hh_l{0,1} contribute W_hh @ h0 == 0 for the length-1 sequence, so they
    # are not materialized; their biases b_hh are still added (PyTorch adds both).
    # TODO(synk): materialize W_hh and add a time-step loop if seq_len > 1 is ever needed.

    def pack_gates(w_ih, b_ih, b_hh):
        # Keep only [i | g | o] rows (forget gate is dead against c0 == 0),
        # transpose to (in, 3H), cast weights to bf16 for the MXU.
        rows = jnp.concatenate(
            [w_ih[0 * H:1 * H], w_ih[2 * H:3 * H], w_ih[3 * H:4 * H]], axis=0)
        b = b_ih + b_hh
        b = jnp.concatenate([b[0 * H:1 * H], b[2 * H:3 * H], b[3 * H:4 * H]])
        return jnp.transpose(rows).astype(jnp.bfloat16), b.reshape(1, 3 * H)

    w1, b1 = pack_gates(w_ih_l0, b_ih_l0, b_hh_l0)
    w2, b2 = pack_gates(w_ih_l1, b_ih_l1, b_hh_l1)
    wfc = w_fc.reshape(1, H)          # row vector for the VPU mul + reduce
    bfc = b_fc.reshape(1, 1)          # scalar, lives in SMEM
    return (w1, b1, w2, b2, wfc, bfc)


def reference_forward(x, params, hidden_size, act_dtype=jnp.float32):
    """Pure-JAX reference mirroring the kernel math (bf16 MXU operands, f32
    accumulate, tanh-based sigmoid, act_dtype elementwise chain)."""
    w1, b1, w2, b2, wfc, bfc = params
    H = hidden_size

    def sigmoid(v):
        return jnp.tanh(v * 0.5) * 0.5 + 0.5

    def cell(inp, w, b):
        g = (jnp.dot(inp.astype(jnp.bfloat16), w,
                     preferred_element_type=jnp.float32) + b).astype(act_dtype)
        i = sigmoid(g[:, 0 * H:1 * H])
        gg = jnp.tanh(g[:, 1 * H:2 * H])
        o = sigmoid(g[:, 2 * H:3 * H])
        return o * jnp.tanh(i * gg)

    h2 = cell(cell(x, w1, b1), w2, b2)
    y = jnp.sum((h2 * wfc).astype(jnp.float32), axis=-1, keepdims=True)
    return y + bfc[0, 0]


if __name__ == "__main__":
    input_size = 512     # nn.LSTM defaults from the module spec
    hidden_size = 128    # lane-aligned gate blocks

    key = jax.random.PRNGKey(0)
    kp, kx1, kx2 = jax.random.split(key, 3)
    params = init_params(kp, input_size, hidden_size)

    act_dtype = _default_act_dtype()
    # bf16 elementwise chain (v6e/v7x) quantizes activations -> looser tolerance.
    tol = 2e-3 if act_dtype == jnp.float32 else 2e-2

    # 1) Small single-tile case: B=16 -> TB=16, grid=(1,).
    x1 = jax.random.normal(kx1, (16, input_size), jnp.float32)
    out1 = jax.block_until_ready(
        lstm_forward(x1, params, hidden_size, act_dtype=act_dtype))
    ref1 = reference_forward(x1, params, hidden_size, act_dtype=act_dtype)
    assert out1.shape == (16, 1)
    assert jnp.allclose(out1, ref1, atol=tol, rtol=tol), \
        float(jnp.max(jnp.abs(out1 - ref1)))

    # 2) Multi-tile case: B=320 -> 2 parallel tiles of TB=256 (padded Bp=512),
    #    exercising batch padding, lane-dense (1, TB) output blocks and MXU M=256.
    x2 = jax.random.normal(kx2, (320, input_size), jnp.float32)
    out2 = jax.block_until_ready(
        lstm_forward(x2, params, hidden_size, act_dtype=act_dtype))
    ref2 = reference_forward(x2, params, hidden_size, act_dtype=act_dtype)
    assert out2.shape == (320, 1)
    assert jnp.allclose(out2, ref2, atol=tol, rtol=tol), \
        float(jnp.max(jnp.abs(out2 - ref2)))

    print("KERNEL_OK")
</pallas_src>

<mosaic_0001>
module attributes {stable_mosaic.version = 11 : i64} {
  func.func @lstm_fc_kernel(%arg0: i32, %arg1: memref<16x512xf32, #tpu.memory_space<vmem>>, %arg2: memref<512x384xbf16, #tpu.memory_space<vmem>>, %arg3: memref<1x384xf32, #tpu.memory_space<vmem>>, %arg4: memref<128x384xbf16, #tpu.memory_space<vmem>>, %arg5: memref<1x384xf32, #tpu.memory_space<vmem>>, %arg6: memref<1x128xf32, #tpu.memory_space<vmem>>, %arg7: memref<1x1xf32, #tpu.memory_space<smem>>, %arg8: memref<1x16xf32, #tpu.memory_space<vmem>>) attributes {dimension_semantics = [#tpu.dimension_semantics<parallel>], iteration_bounds = array<i64: 1>, scalar_prefetch = 0 : i64, scratch_operands = 0 : i64, tpu.core_type = #tpu.core_type<tc>, window_params = [{transform_indices = @transform_0, window_bounds = array<i64: 16, 512>}, {pipeline_mode = #tpu.pipeline_mode<synchronous>, transform_indices = @transform_1, window_bounds = array<i64: 512, 384>}, {pipeline_mode = #tpu.pipeline_mode<synchronous>, transform_indices = @transform_2, window_bounds = array<i64: 1, 384>}, {pipeline_mode = #tpu.pipeline_mode<synchronous>, transform_indices = @transform_3, window_bounds = array<i64: 128, 384>}, {pipeline_mode = #tpu.pipeline_mode<synchronous>, transform_indices = @transform_4, window_bounds = array<i64: 1, 384>}, {pipeline_mode = #tpu.pipeline_mode<synchronous>, transform_indices = @transform_5, window_bounds = array<i64: 1, 128>}, {transform_indices = @transform_6, window_bounds = array<i64: 1, 1>}, {transform_indices = @transform_7, window_bounds = array<i64: 1, 16>}]} {
    %c0 = arith.constant 0 : index
    %c0_0 = arith.constant 0 : index
    %0 = vector.load %arg1[%c0, %c0_0] : memref<16x512xf32, #tpu.memory_space<vmem>>, vector<16x512xf32>
    %1 = arith.truncf %0 : vector<16x512xf32> to vector<16x512xbf16>
    %c0_1 = arith.constant 0 : index
    %c0_2 = arith.constant 0 : index
    %2 = vector.load %arg2[%c0_1, %c0_2] : memref<512x384xbf16, #tpu.memory_space<vmem>>, vector<512x384xbf16>
    %cst = arith.constant dense<0.000000e+00> : vector<16x384xf32>
    %3 = tpu.matmul %1, %2, %cst {dimension_numbers = #tpu.dot_dimension_numbers<[1], [0], [0], [1], [0, 0, 1, 1], [], []>} : vector<16x512xbf16>, vector<512x384xbf16>, vector<16x384xf32> -> vector<16x384xf32>
    %c0_3 = arith.constant 0 : index
    %c0_4 = arith.constant 0 : index
    %4 = vector.load %arg3[%c0_3, %c0_4] : memref<1x384xf32, #tpu.memory_space<vmem>>, vector<1x384xf32>
    %5 = vector.broadcast %4 : vector<1x384xf32> to vector<16x384xf32>
    %6 = arith.addf %3, %5 : vector<16x384xf32>
    %7 = vector.extract_strided_slice %6 {offsets = [0, 0], sizes = [16, 128], strides = [1, 1]} : vector<16x384xf32> to vector<16x128xf32>
    %cst_5 = arith.constant 5.000000e-01 : f32
    %8 = vector.broadcast %cst_5 : f32 to vector<16x128xf32>
    %9 = arith.mulf %7, %8 : vector<16x128xf32>
    %10 = math.tanh %9 : vector<16x128xf32>
    %cst_6 = arith.constant 5.000000e-01 : f32
    %11 = vector.broadcast %cst_6 : f32 to vector<16x128xf32>
    %12 = arith.mulf %10, %11 : vector<16x128xf32>
    %cst_7 = arith.constant 5.000000e-01 : f32
    %13 = vector.broadcast %cst_7 : f32 to vector<16x128xf32>
    %14 = arith.addf %12, %13 : vector<16x128xf32>
    %15 = vector.extract_strided_slice %6 {offsets = [0, 128], sizes = [16, 128], strides = [1, 1]} : vector<16x384xf32> to vector<16x128xf32>
    %16 = math.tanh %15 : vector<16x128xf32>
    %17 = vector.extract_strided_slice %6 {offsets = [0, 256], sizes = [16, 128], strides = [1, 1]} : vector<16x384xf32> to vector<16x128xf32>
    %cst_8 = arith.constant 5.000000e-01 : f32
    %18 = vector.broadcast %cst_8 : f32 to vector<16x128xf32>
    %19 = arith.mulf %17, %18 : vector<16x128xf32>
    %20 = math.tanh %19 : vector<16x128xf32>
    %cst_9 = arith.constant 5.000000e-01 : f32
    %21 = vector.broadcast %cst_9 : f32 to vector<16x128xf32>
    %22 = arith.mulf %20, %21 : vector<16x128xf32>
    %cst_10 = arith.constant 5.000000e-01 : f32
    %23 = vector.broadcast %cst_10 : f32 to vector<16x128xf32>
    %24 = arith.addf %22, %23 : vector<16x128xf32>
    %25 = arith.mulf %14, %16 : vector<16x128xf32>
    %26 = math.tanh %25 : vector<16x128xf32>
    %27 = arith.mulf %24, %26 : vector<16x128xf32>
    %28 = arith.truncf %27 : vector<16x128xf32> to vector<16x128xbf16>
    %c0_11 = arith.constant 0 : index
    %c0_12 = arith.constant 0 : index
    %29 = vector.load %arg4[%c0_11, %c0_12] : memref<128x384xbf16, #tpu.memory_space<vmem>>, vector<128x384xbf16>
    %cst_13 = arith.constant dense<0.000000e+00> : vector<16x384xf32>
    %30 = tpu.matmul %28, %29, %cst_13 {dimension_numbers = #tpu.dot_dimension_numbers<[1], [0], [0], [1], [0, 0, 1, 1], [], []>} : vector<16x128xbf16>, vector<128x384xbf16>, vector<16x384xf32> -> vector<16x384xf32>
    %c0_14 = arith.constant 0 : index
    %c0_15 = arith.constant 0 : index
    %31 = vector.load %arg5[%c0_14, %c0_15] : memref<1x384xf32, #tpu.memory_space<vmem>>, vector<1x384xf32>
    %32 = vector.broadcast %31 : vector<1x384xf32> to vector<16x384xf32>
    %33 = arith.addf %30, %32 : vector<16x384xf32>
    %34 = vector.extract_strided_slice %33 {offsets = [0, 0], sizes = [16, 128], strides = [1, 1]} : vector<16x384xf32> to vector<16x128xf32>
    %cst_16 = arith.constant 5.000000e-01 : f32
    %35 = vector.broadcast %cst_16 : f32 to vector<16x128xf32>
    %36 = arith.mulf %34, %35 : vector<16x128xf32>
    %37 = math.tanh %36 : vector<16x128xf32>
    %cst_17 = arith.constant 5.000000e-01 : f32
    %38 = vector.broadcast %cst_17 : f32 to vector<16x128xf32>
    %39 = arith.mulf %37, %38 : vector<16x128xf32>
    %cst_18 = arith.constant 5.000000e-01 : f32
    %40 = vector.broadcast %cst_18 : f32 to vector<16x128xf32>
    %41 = arith.addf %39, %40 : vector<16x128xf32>
    %42 = vector.extract_strided_slice %33 {offsets = [0, 128], sizes = [16, 128], strides = [1, 1]} : vector<16x384xf32> to vector<16x128xf32>
    %43 = math.tanh %42 : vector<16x128xf32>
    %44 = vector.extract_strided_slice %33 {offsets = [0, 256], sizes = [16, 128], strides = [1, 1]} : vector<16x384xf32> to vector<16x128xf32>
    %cst_19 = arith.constant 5.000000e-01 : f32
    %45 = vector.broadcast %cst_19 : f32 to vector<16x128xf32>
    %46 = arith.mulf %44, %45 : vector<16x128xf32>
    %47 = math.tanh %46 : vector<16x128xf32>
    %cst_20 = arith.constant 5.000000e-01 : f32
    %48 = vector.broadcast %cst_20 : f32 to vector<16x128xf32>
    %49 = arith.mulf %47, %48 : vector<16x128xf32>
    %cst_21 = arith.constant 5.000000e-01 : f32
    %50 = vector.broadcast %cst_21 : f32 to vector<16x128xf32>
    %51 = arith.addf %49, %50 : vector<16x128xf32>
    %52 = arith.mulf %41, %43 : vector<16x128xf32>
    %53 = math.tanh %52 : vector<16x128xf32>
    %54 = arith.mulf %51, %53 : vector<16x128xf32>
    %c0_22 = arith.constant 0 : index
    %c0_23 = arith.constant 0 : index
    %55 = vector.load %arg6[%c0_22, %c0_23] : memref<1x128xf32, #tpu.memory_space<vmem>>, vector<1x128xf32>
    %56 = vector.broadcast %55 : vector<1x128xf32> to vector<16x128xf32>
    %57 = arith.mulf %54, %56 : vector<16x128xf32>
    %58 = tpu.transpose %57, [1, 0] : vector<16x128xf32> -> vector<128x16xf32>
    %cst_24 = arith.constant dense<0.000000e+00> : vector<16xf32>
    %59 = vector.multi_reduction <add>, %58, %cst_24 [0] : vector<128x16xf32> to vector<16xf32>
    %60 = vector.shape_cast %59 : vector<16xf32> to vector<1x16xf32>
    %c0_25 = arith.constant 0 : index
    %c0_26 = arith.constant 0 : index
    %61 = memref.load %arg7[%c0_25, %c0_26] : memref<1x1xf32, #tpu.memory_space<smem>>
    %62 = vector.broadcast %61 : f32 to vector<1x16xf32>
    %63 = arith.addf %60, %62 : vector<1x16xf32>
    %c0_27 = arith.constant 0 : index
    %c0_28 = arith.constant 0 : index
    %64 = vector.load %arg8[%c0_27, %c0_28] : memref<1x16xf32, #tpu.memory_space<vmem>>, vector<1x16xf32>
    tpu.vector_store %arg8[%c0_27, %c0_28], %63 {strides = array<i32>} : memref<1x16xf32, #tpu.memory_space<vmem>>, vector<1x16xf32>,
    return
  }
  func.func @transform_0(%arg0: i32) -> (i32, i32) {
    %c0_i32 = arith.constant 0 : i32
    %c0_i32_0 = arith.constant 0 : i32
    return %arg0, %c0_i32 : i32, i32
  }
  func.func @transform_1(%arg0: i32) -> (i32, i32) {
    %c0_i32 = arith.constant 0 : i32
    %c0_i32_0 = arith.constant 0 : i32
    %c0_i32_1 = arith.constant 0 : i32
    return %c0_i32, %c0_i32_0 : i32, i32
  }
  func.func @transform_2(%arg0: i32) -> (i32, i32) {
    %c0_i32 = arith.constant 0 : i32
    %c0_i32_0 = arith.constant 0 : i32
    %c0_i32_1 = arith.constant 0 : i32
    return %c0_i32, %c0_i32_0 : i32, i32
  }
  func.func @transform_3(%arg0: i32) -> (i32, i32) {
    %c0_i32 = arith.constant 0 : i32
    %c0_i32_0 = arith.constant 0 : i32
    %c0_i32_1 = arith.constant 0 : i32
    return %c0_i32, %c0_i32_0 : i32, i32
  }
  func.func @transform_4(%arg0: i32) -> (i32, i32) {
    %c0_i32 = arith.constant 0 : i32
    %c0_i32_0 = arith.constant 0 : i32
    %c0_i32_1 = arith.constant 0 : i32
    return %c0_i32, %c0_i32_0 : i32, i32
  }
  func.func @transform_5(%arg0: i32) -> (i32, i32) {
    %c0_i32 = arith.constant 0 : i32
    %c0_i32_0 = arith.constant 0 : i32
    %c0_i32_1 = arith.constant 0 : i32
    return %c0_i32, %c0_i32_0 : i32, i32
  }
  func.func @transform_6(%arg0: i32) -> (i32, i32) {
    %c0_i32 = arith.constant 0 : i32
    %c0_i32_0 = arith.constant 0 : i32
    %c0_i32_1 = arith.constant 0 : i32
    return %c0_i32, %c0_i32_0 : i32, i32
  }
  func.func @transform_7(%arg0: i32) -> (i32, i32) {
    %c0_i32 = arith.constant 0 : i32
    %c0_i32_0 = arith.constant 0 : i32
    return %c0_i32, %arg0 : i32, i32
  }
}

</mosaic_0001>

<llo_original>
// kernel: tpu_custom_call.1
$region0: #{tpu_custom_call.1}
  #allocation0 [shape = 'u32[]', space=smem, size = 0x4, offset = 0x4, fixed_abs, tag = 'smem constant byte address 0x4 - core index']
  #allocation1 [shape = 'u32[72,128]{1,0:T(1,128)}', space=vmem, size = 0x9000, scoped, tag = 'internal scratch']
  #allocation2 [shape = 'f32[1,1]{1,0:T(1,128)S(6)}', space=smem, size = 0x200, scoped, tag = 'scoped memory for tpu_custom_call.1']
  %s0 = inlined_call_operand.hbm [shape: f32[16,512], index: 0, kind: input, shape index: {}]
  %s1 = inlined_call_operand.hbm [shape: bf16[512,384], index: 1, kind: input, shape index: {}]
  %s2 = inlined_call_operand.vmem [shape: f32[1,384], index: 2, kind: input, shape index: {}]
  %s3 = inlined_call_operand.hbm [shape: bf16[128,384], index: 3, kind: input, shape index: {}]
  %s4 = inlined_call_operand.hbm [shape: f32[1,384], index: 4, kind: input, shape index: {}]
  %s5 = inlined_call_operand.vmem [shape: f32[1,128], index: 5, kind: input, shape index: {}]
  %s6 = inlined_call_operand.<no memory space> [shape: f32[1,1], index: 6, kind: input, shape index: {}]
  %s7 = inlined_call_operand.hbm [shape: f32[1,16], index: 7, kind: output, shape index: {}]
  %s8 = sld [smem:[#allocation0]]
  $region54: #{tpu_custom_call.1} parent=0
    _
  %s10 = ssub.s32 1, %s8
  %s11 = scalar_select 0, %s10, %s8
  %12 = sst [smem:[#allocation2]] %s6
  $region1: #{tpu_custom_call.1} parent=0
    #allocation3 [shape = 'u8[32768]{0}', space=vmem, size = 0x8000, scoped, tag = 'input window, operand 0, single buffered']
    #allocation4 [shape = 's32[1]{0}', space=sflag, size = 0x4, scoped, tag = 'scoped memory for tpu_custom_call.1']
    #allocation5 [shape = 's32[1]{0}', space=sflag, size = 0x4, scoped, tag = 'scoped memory for tpu_custom_call.1']
    #allocation6 [shape = 'u8[393216]{0}', space=vmem, size = 0x60000, scoped, tag = 'input window, operand 1, single buffered']
    #allocation7 [shape = 's32[1]{0}', space=sflag, size = 0x4, scoped, tag = 'scoped memory for tpu_custom_call.1']
    #allocation8 [shape = 'u8[98304]{0}', space=vmem, size = 0x18000, scoped, tag = 'input window, operand 3, single buffered']
    #allocation9 [shape = 'u8[1536]{0}', space=vmem, size = 0x800, scoped, tag = 'input window, operand 4, single buffered']
    #allocation10 [shape = 's32[1]{0}', space=sflag, size = 0x4, scoped, tag = 'scoped memory for tpu_custom_call.1']
    #allocation11 [shape = 'u8[512]{0}', space=vmem, size = 0x400, scoped, tag = 'output window, operand 0, single buffered']
    %13 = vsyncpa [#allocation4], 0
    %14 = vsyncpa [#allocation7], 0
    %15 = vsyncpa [#allocation10], 0
    %16 = vsyncpa [#allocation5], 0
    // Predicated region
    $region2: #{tpu_custom_call.1} parent=1 // pred_check
      _
    $region3: #{tpu_custom_call.1} parent=1 // pred_check_branch
      %18 = sbr.rel (0) target = $region5
    $region4: #{tpu_custom_call.1} parent=1 // pred_region
      %20 = vsyncadd [#allocation4], 0
      %s21 = sshll.u32 %s0, 4
      %s22 = int_to_ptr.hbm [resolvable:$true] %s21
      %s23 = sshll.u32 [#allocation3], 4
      %s24 = int_to_ptr.vmem [resolvable:$true] %s23
      %29 = dma.hbm_to_vmem [thread:$0]  %s22, 1024, %s24, [#allocation4], 512, 512, 32
    $region5: #{tpu_custom_call.1} parent=1 // pred_fallthru
      _
    // Predicated region
    $region6: #{tpu_custom_call.1} parent=1 // pred_check
      _
    $region7: #{tpu_custom_call.1} parent=1 // pred_check_branch
      %31 = sbr.rel (0) target = $region9
    $region8: #{tpu_custom_call.1} parent=1 // pred_region
      %33 = vsyncadd [#allocation7], 0
      %s34 = sshll.u32 %s1, 4
      %s35 = int_to_ptr.hbm [resolvable:$true] %s34
      %s36 = sshll.u32 [#allocation6], 4
      %s37 = int_to_ptr.vmem [resolvable:$true] %s36
      %42 = dma.hbm_to_vmem [thread:$0]  %s35, 12288, %s37, [#allocation7], 192, 192, 12
    $region9: #{tpu_custom_call.1} parent=1 // pred_fallthru
      _
    // Predicated region
    $region10: #{tpu_custom_call.1} parent=1 // pred_check
      _
    $region11: #{tpu_custom_call.1} parent=1 // pred_check_branch
      %44 = sbr.rel (0) target = $region13
    $region12: #{tpu_custom_call.1} parent=1 // pred_region
      _
    $region13: #{tpu_custom_call.1} parent=1 // pred_fallthru
      _
    // Predicated region
    $region14: #{tpu_custom_call.1} parent=1 // pred_check
      _
    $region15: #{tpu_custom_call.1} parent=1 // pred_check_branch
      %46 = sbr.rel (0) target = $region17
    $region16: #{tpu_custom_call.1} parent=1 // pred_region
      %48 = vsyncadd [#allocation7], 0
      %s49 = sshll.u32 %s3, 4
      %s50 = int_to_ptr.hbm [resolvable:$true] %s49
      %s51 = sshll.u32 [#allocation8], 4
      %s52 = int_to_ptr.vmem [resolvable:$true] %s51
      %57 = dma.hbm_to_vmem [thread:$0]  %s50, 3072, %s52, [#allocation7], 192, 192, 12
    $region17: #{tpu_custom_call.1} parent=1 // pred_fallthru
      _
    // Predicated region
    $region18: #{tpu_custom_call.1} parent=1 // pred_check
      _
    $region19: #{tpu_custom_call.1} parent=1 // pred_check_branch
      %59 = sbr.rel (0) target = $region21
    $region20: #{tpu_custom_call.1} parent=1 // pred_region
      %61 = vsyncadd [#allocation10], 0
      %s63 = sshll.u32 %s4, 4
      %s64 = int_to_ptr.hbm [resolvable:$true] %s63
      %s65 = sshll.u32 [#allocation9], 4
      %s66 = int_to_ptr.vmem [resolvable:$true] %s65
      %68 = dma.hbm_to_vmem [thread:$0]  %s64, 48, %s66, [#allocation10]
    $region21: #{tpu_custom_call.1} parent=1 // pred_fallthru
      _
    // Predicated region
    $region22: #{tpu_custom_call.1} parent=1 // pred_check
      _
    $region23: #{tpu_custom_call.1} parent=1 // pred_check_branch
      %70 = sbr.rel (0) target = $region25
    $region24: #{tpu_custom_call.1} parent=1 // pred_region
      _
    $region25: #{tpu_custom_call.1} parent=1 // pred_fallthru
      _
    // Predicated region
    $region26: #{tpu_custom_call.1} parent=1 // pred_check
      _
    $region27: #{tpu_custom_call.1} parent=1 // pred_check_branch
      %72 = sbr.rel (0) target = $region29
    $region28: #{tpu_custom_call.1} parent=1 // pred_region
      _
    $region29: #{tpu_custom_call.1} parent=1 // pred_fallthru
      _
    // Predicated region
    $region30: #{tpu_custom_call.1} parent=1 // pred_check
      _
    $region31: #{tpu_custom_call.1} parent=1 // pred_check_branch
      %74 = sbr.rel (0) target = $region33
    $region32: #{tpu_custom_call.1} parent=1 // pred_region
      %76 = dma.done [#allocation4], 1024
    $region33: #{tpu_custom_call.1} parent=1 // pred_fallthru
      _
    // Predicated region
    $region34: #{tpu_custom_call.1} parent=1 // pred_check
      _
    $region35: #{tpu_custom_call.1} parent=1 // pred_check_branch
      %78 = sbr.rel (0) target = $region37
    $region36: #{tpu_custom_call.1} parent=1 // pred_region
      %80 = dma.done [#allocation7], 12288
    $region37: #{tpu_custom_call.1} parent=1 // pred_fallthru
      _
    // Predicated region
    $region38: #{tpu_custom_call.1} parent=1 // pred_check
      _
    $region39: #{tpu_custom_call.1} parent=1 // pred_check_branch
      %82 = sbr.rel (0) target = $region41
    $region40: #{tpu_custom_call.1} parent=1 // pred_region
      %84 = dma.done [#allocation7], 3072
    $region41: #{tpu_custom_call.1} parent=1 // pred_fallthru
      _
    // Predicated region
    $region42: #{tpu_custom_call.1} parent=1 // pred_check
      _
    $region43: #{tpu_custom_call.1} parent=1 // pred_check_branch
      %86 = sbr.rel (0) target = $region45
    $region44: #{tpu_custom_call.1} parent=1 // pred_region
      %88 = dma.done [#allocation10], 48
    $region45: #{tpu_custom_call.1} parent=1 // pred_fallthru
      _
    %v89 = vld [vmem:[#allocation3] sm:$0xff]
    %v90 = vld [vmem:[#allocation3 + $0x8] sm:$0xff]
    %v91 = vld [vmem:[#allocation3 + $0x10] sm:$0xff]
    %v92 = vld [vmem:[#allocation3 + $0x18] sm:$0xff]
    %v93 = vld [vmem:[#allocation3 + $0x20] sm:$0xff]
    %v94 = vld [vmem:[#allocation3 + $0x28] sm:$0xff]
    %v95 = vld [vmem:[#allocation3 + $0x30] sm:$0xff]
    %v96 = vld [vmem:[#allocation3 + $0x38] sm:$0xff]
    %v97 = vpack.c.bf16 %v93, %v89
    %v98 = vpack.c.bf16 %v94, %v90
    %v99 = vpack.c.bf16 %v95, %v91
    %v100 = vpack.c.bf16 %v96, %v92
    %v101 = vld [vmem:[#allocation6] sm:$0xff]
    %v102 = vld [vmem:[#allocation6 + $0x8] sm:$0xf]
    %v103 = vld [vmem:[#allocation6 + $0xc] sm:$0xff]
    %v104 = vld [vmem:[#allocation6 + $0x14] sm:$0xf]
    %v105 = vld [vmem:[#allocation6 + $0x18] sm:$0xff]
    %v106 = vld [vmem:[#allocation6 + $0x20] sm:$0xf]
    %v107 = vld [vmem:[#allocation6 + $0x24] sm:$0xff]
    %v108 = vld [vmem:[#allocation6 + $0x2c] sm:$0xf]
    %v109 = vld [vmem:[#allocation6 + $0x30] sm:$0xff]
    %v110 = vld [vmem:[#allocation6 + $0x38] sm:$0xf]
    %v111 = vld [vmem:[#allocation6 + $0x3c] sm:$0xff]
    %v112 = vld [vmem:[#allocation6 + $0x44] sm:$0xf]
    %v113 = vld [vmem:[#allocation6 + $0x48] sm:$0xff]
    %v114 = vld [vmem:[#allocation6 + $0x50] sm:$0xf]
    %v115 = vld [vmem:[#allocation6 + $0x54] sm:$0xff]
    %v116 = vld [vmem:[#allocation6 + $0x5c] sm:$0xf]
    %v117 = vld [vmem:[#allocation6 + $0x60] sm:$0xff]
    %v118 = vld [vmem:[#allocation6 + $0x68] sm:$0xf]
    %v119 = vld [vmem:[#allocation6 + $0x6c] sm:$0xff]
    %v120 = vld [vmem:[#allocation6 + $0x74] sm:$0xf]
    %v121 = vld [vmem:[#allocation6 + $0x78] sm:$0xff]
    %v122 = vld [vmem:[#allocation6 + $0x80] sm:$0xf]
    %v123 = vld [vmem:[#allocation6 + $0x84] sm:$0xff]
    %v124 = vld [vmem:[#allocation6 + $0x8c] sm:$0xf]
    %v125 = vld [vmem:[#allocation6 + $0x90] sm:$0xff]
    %v126 = vld [vmem:[#allocation6 + $0x98] sm:$0xf]
    %v127 = vld [vmem:[#allocation6 + $0x9c] sm:$0xff]
    %v128 = vld [vmem:[#allocation6 + $0xa4] sm:$0xf]
    %v129 = vld [vmem:[#allocation6 + $0xa8] sm:$0xff]
    %v130 = vld [vmem:[#allocation6 + $0xb0] sm:$0xf]
    %v131 = vld [vmem:[#allocation6 + $0xb4] sm:$0xff]
    %v132 = vld [vmem:[#allocation6 + $0xbc] sm:$0xf]
    %v133 = vld [vmem:[#allocation6 + $0xc0] sm:$0xff]
    %v134 = vld [vmem:[#allocation6 + $0xc8] sm:$0xf]
    %v135 = vld [vmem:[#allocation6 + $0xcc] sm:$0xff]
    %v136 = vld [vmem:[#allocation6 + $0xd4] sm:$0xf]
    %v137 = vld [vmem:[#allocation6 + $0xd8] sm:$0xff]
    %v138 = vld [vmem:[#allocation6 + $0xe0] sm:$0xf]
    %v139 = vld [vmem:[#allocation6 + $0xe4] sm:$0xff]
    %v140 = vld [vmem:[#allocation6 + $0xec] sm:$0xf]
    %v141 = vld [vmem:[#allocation6 + $0xf0] sm:$0xff]
    %v142 = vld [vmem:[#allocation6 + $0xf8] sm:$0xf]
    %v143 = vld [vmem:[#allocation6 + $0xfc] sm:$0xff]
    %v144 = vld [vmem:[#allocation6 + $0x104] sm:$0xf]
    %v145 = vld [vmem:[#allocation6 + $0x108] sm:$0xff]
    %v146 = vld [vmem:[#allocation6 + $0x110] sm:$0xf]
    %v147 = vld [vmem:[#allocation6 + $0x114] sm:$0xff]
    %v148 = vld [vmem:[#allocation6 + $0x11c] sm:$0xf]
    %v149 = vld [vmem:[#allocation6 + $0x120] sm:$0xff]
    %v150 = vld [vmem:[#allocation6 + $0x128] sm:$0xf]
    %v151 = vld [vmem:[#allocation6 + $0x12c] sm:$0xff]
    %v152 = vld [vmem:[#allocation6 + $0x134] sm:$0xf]
    %v153 = vld [vmem:[#allocation6 + $0x138] sm:$0xff]
    %v154 = vld [vmem:[#allocation6 + $0x140] sm:$0xf]
    %v155 = vld [vmem:[#allocation6 + $0x144] sm:$0xff]
    %v156 = vld [vmem:[#allocation6 + $0x14c] sm:$0xf]
    %v157 = vld [vmem:[#allocation6 + $0x150] sm:$0xff]
    %v158 = vld [vmem:[#allocation6 + $0x158] sm:$0xf]
    %v159 = vld [vmem:[#allocation6 + $0x15c] sm:$0xff]
    %v160 = vld [vmem:[#allocation6 + $0x164] sm:$0xf]
    %v161 = vld [vmem:[#allocation6 + $0x168] sm:$0xff]
    %v162 = vld [vmem:[#allocation6 + $0x170] sm:$0xf]
    %v163 = vld [vmem:[#allocation6 + $0x174] sm:$0xff]
    %v164 = vld [vmem:[#allocation6 + $0x17c] sm:$0xf]
    %v165 = vld [vmem:[#allocation6 + $0x180] sm:$0xff]
    %v166 = vld [vmem:[#allocation6 + $0x188] sm:$0xf]
    %v167 = vld [vmem:[#allocation6 + $0x18c] sm:$0xff]
    %v168 = vld [vmem:[#allocation6 + $0x194] sm:$0xf]
    %v169 = vld [vmem:[#allocation6 + $0x198] sm:$0xff]
    %v170 = vld [vmem:[#allocation6 + $0x1a0] sm:$0xf]
    %v171 = vld [vmem:[#allocation6 + $0x1a4] sm:$0xff]
    %v172 = vld [vmem:[#allocation6 + $0x1ac] sm:$0xf]
    %v173 = vld [vmem:[#allocation6 + $0x1b0] sm:$0xff]
    %v174 = vld [vmem:[#allocation6 + $0x1b8] sm:$0xf]
    %v175 = vld [vmem:[#allocation6 + $0x1bc] sm:$0xff]
    %v176 = vld [vmem:[#allocation6 + $0x1c4] sm:$0xf]
    %v177 = vld [vmem:[#allocation6 + $0x1c8] sm:$0xff]
    %v178 = vld [vmem:[#allocation6 + $0x1d0] sm:$0xf]
    %v179 = vld [vmem:[#allocation6 + $0x1d4] sm:$0xff]
    %v180 = vld [vmem:[#allocation6 + $0x1dc] sm:$0xf]
    %v181 = vld [vmem:[#allocation6 + $0x1e0] sm:$0xff]
    %v182 = vld [vmem:[#allocation6 + $0x1e8] sm:$0xf]
    %v183 = vld [vmem:[#allocation6 + $0x1ec] sm:$0xff]
    %v184 = vld [vmem:[#allocation6 + $0x1f4] sm:$0xf]
    %v185 = vld [vmem:[#allocation6 + $0x1f8] sm:$0xff]
    %v186 = vld [vmem:[#allocation6 + $0x200] sm:$0xf]
    %v187 = vld [vmem:[#allocation6 + $0x204] sm:$0xff]
    %v188 = vld [vmem:[#allocation6 + $0x20c] sm:$0xf]
    %v189 = vld [vmem:[#allocation6 + $0x210] sm:$0xff]
    %v190 = vld [vmem:[#allocation6 + $0x218] sm:$0xf]
    %v191 = vld [vmem:[#allocation6 + $0x21c] sm:$0xff]
    %v192 = vld [vmem:[#allocation6 + $0x224] sm:$0xf]
    %v193 = vld [vmem:[#allocation6 + $0x228] sm:$0xff]
    %v194 = vld [vmem:[#allocation6 + $0x230] sm:$0xf]
    %v195 = vld [vmem:[#allocation6 + $0x234] sm:$0xff]
    %v196 = vld [vmem:[#allocation6 + $0x23c] sm:$0xf]
    %v197 = vld [vmem:[#allocation6 + $0x240] sm:$0xff]
    %v198 = vld [vmem:[#allocation6 + $0x248] sm:$0xf]
    %v199 = vld [vmem:[#allocation6 + $0x24c] sm:$0xff]
    %v200 = vld [vmem:[#allocation6 + $0x254] sm:$0xf]
    %v201 = vld [vmem:[#allocation6 + $0x258] sm:$0xff]
    %v202 = vld [vmem:[#allocation6 + $0x260] sm:$0xf]
    %v203 = vld [vmem:[#allocation6 + $0x264] sm:$0xff]
    %v204 = vld [vmem:[#allocation6 + $0x26c] sm:$0xf]
    %v205 = vld [vmem:[#allocation6 + $0x270] sm:$0xff]
    %v206 = vld [vmem:[#allocation6 + $0x278] sm:$0xf]
    %v207 = vld [vmem:[#allocation6 + $0x27c] sm:$0xff]
    %v208 = vld [vmem:[#allocation6 + $0x284] sm:$0xf]
    %v209 = vld [vmem:[#allocation6 + $0x288] sm:$0xff]
    %v210 = vld [vmem:[#allocation6 + $0x290] sm:$0xf]
    %v211 = vld [vmem:[#allocation6 + $0x294] sm:$0xff]
    %v212 = vld [vmem:[#allocation6 + $0x29c] sm:$0xf]
    %v213 = vld [vmem:[#allocation6 + $0x2a0] sm:$0xff]
    %v214 = vld [vmem:[#allocation6 + $0x2a8] sm:$0xf]
    %v215 = vld [vmem:[#allocation6 + $0x2ac] sm:$0xff]
    %v216 = vld [vmem:[#allocation6 + $0x2b4] sm:$0xf]
    %v217 = vld [vmem:[#allocation6 + $0x2b8] sm:$0xff]
    %v218 = vld [vmem:[#allocation6 + $0x2c0] sm:$0xf]
    %v219 = vld [vmem:[#allocation6 + $0x2c4] sm:$0xff]
    %v220 = vld [vmem:[#allocation6 + $0x2cc] sm:$0xf]
    %v221 = vld [vmem:[#allocation6 + $0x2d0] sm:$0xff]
    %v222 = vld [vmem:[#allocation6 + $0x2d8] sm:$0xf]
    %v223 = vld [vmem:[#allocation6 + $0x2dc] sm:$0xff]
    %v224 = vld [vmem:[#allocation6 + $0x2e4] sm:$0xf]
    %v225 = vld [vmem:[#allocation6 + $0x2e8] sm:$0xff]
    %v226 = vld [vmem:[#allocation6 + $0x2f0] sm:$0xf]
    %v227 = vld [vmem:[#allocation6 + $0x2f4] sm:$0xff]
    %v228 = vld [vmem:[#allocation6 + $0x2fc] sm:$0xf]
    %v229 = vld [vmem:[%s2] sm:$0x7]
    %v231 = vperm.slane %v229, 0
    %v232 = vperm.slane %v229, 1
    %v233 = vperm.slane %v229, 2
    %v365 = vunpack.c.l.b16 %v101
    %v366 = vunpack.c.h.b16 %v101
    %v367 = vunpack.c.l.b16 %v102
    %v368 = vunpack.c.l.b16 %v103
    %v369 = vunpack.c.h.b16 %v103
    %v370 = vunpack.c.l.b16 %v104
    %v371 = vunpack.c.l.b16 %v105
    %v372 = vunpack.c.h.b16 %v105
    %v373 = vunpack.c.l.b16 %v106
    %v374 = vunpack.c.l.b16 %v107
    %v375 = vunpack.c.h.b16 %v107
    %v376 = vunpack.c.l.b16 %v108
    %v377 = vunpack.c.l.b16 %v109
    %v378 = vunpack.c.h.b16 %v109
    %v379 = vunpack.c.l.b16 %v110
    %v380 = vunpack.c.l.b16 %v111
    %v381 = vunpack.c.h.b16 %v111
    %v382 = vunpack.c.l.b16 %v112
    %v383 = vunpack.c.l.b16 %v113
    %v384 = vunpack.c.h.b16 %v113
    %v385 = vunpack.c.l.b16 %v114
    %v386 = vunpack.c.l.b16 %v115
    %v387 = vunpack.c.h.b16 %v115
    %v388 = vunpack.c.l.b16 %v116
    %v389 = vunpack.c.l.b16 %v117
    %v390 = vunpack.c.h.b16 %v117
    %v391 = vunpack.c.l.b16 %v118
    %v392 = vunpack.c.l.b16 %v119
    %v393 = vunpack.c.h.b16 %v119
    %v394 = vunpack.c.l.b16 %v120
    %v395 = vunpack.c.l.b16 %v121
    %v396 = vunpack.c.h.b16 %v121
    %v397 = vunpack.c.l.b16 %v122
    %v398 = vunpack.c.l.b16 %v123
    %v399 = vunpack.c.h.b16 %v123
    %v400 = vunpack.c.l.b16 %v124
    %v401 = vunpack.c.l.b16 %v125
    %v402 = vunpack.c.h.b16 %v125
    %v403 = vunpack.c.l.b16 %v126
    %v404 = vunpack.c.l.b16 %v127
    %v405 = vunpack.c.h.b16 %v127
    %v406 = vunpack.c.l.b16 %v128
    %v407 = vunpack.c.l.b16 %v129
    %v408 = vunpack.c.h.b16 %v129
    %v409 = vunpack.c.l.b16 %v130
    %v410 = vunpack.c.l.b16 %v131
    %v411 = vunpack.c.h.b16 %v131
    %v412 = vunpack.c.l.b16 %v132
    %v413 = vunpack.c.l.b16 %v133
    %v414 = vunpack.c.h.b16 %v133
    %v415 = vunpack.c.l.b16 %v134
    %v416 = vunpack.c.l.b16 %v135
    %v417 = vunpack.c.h.b16 %v135
    %v418 = vunpack.c.l.b16 %v136
    %v419 = vunpack.c.l.b16 %v137
    %v420 = vunpack.c.h.b16 %v137
    %v421 = vunpack.c.l.b16 %v138
    %v422 = vunpack.c.l.b16 %v139
    %v423 = vunpack.c.h.b16 %v139
    %v424 = vunpack.c.l.b16 %v140
    %v425 = vunpack.c.l.b16 %v141
    %v426 = vunpack.c.h.b16 %v141
    %v427 = vunpack.c.l.b16 %v142
    %v428 = vunpack.c.l.b16 %v143
    %v429 = vunpack.c.h.b16 %v143
    %v430 = vunpack.c.l.b16 %v144
    %v431 = vunpack.c.l.b16 %v145
    %v432 = vunpack.c.h.b16 %v145
    %v433 = vunpack.c.l.b16 %v146
    %v434 = vunpack.c.l.b16 %v147
    %v435 = vunpack.c.h.b16 %v147
    %v436 = vunpack.c.l.b16 %v148
    %v437 = vunpack.c.l.b16 %v149
    %v438 = vunpack.c.h.b16 %v149
    %v439 = vunpack.c.l.b16 %v150
    %v440 = vunpack.c.l.b16 %v151
    %v441 = vunpack.c.h.b16 %v151
    %v442 = vunpack.c.l.b16 %v152
    %v443 = vunpack.c.l.b16 %v153
    %v444 = vunpack.c.h.b16 %v153
    %v445 = vunpack.c.l.b16 %v154
    %v446 = vunpack.c.l.b16 %v155
    %v447 = vunpack.c.h.b16 %v155
    %v448 = vunpack.c.l.b16 %v156
    %v449 = vunpack.c.l.b16 %v157
    %v450 = vunpack.c.h.b16 %v157
    %v451 = vunpack.c.l.b16 %v158
    %v452 = vunpack.c.l.b16 %v159
    %v453 = vunpack.c.h.b16 %v159
    %v454 = vunpack.c.l.b16 %v160
    %v455 = vunpack.c.l.b16 %v161
    %v456 = vunpack.c.h.b16 %v161
    %v457 = vunpack.c.l.b16 %v162
    %v458 = vunpack.c.l.b16 %v163
    %v459 = vunpack.c.h.b16 %v163
    %v460 = vunpack.c.l.b16 %v164
    %v461 = vunpack.c.l.b16 %v165
    %v462 = vunpack.c.h.b16 %v165
    %v463 = vunpack.c.l.b16 %v166
    %v464 = vunpack.c.l.b16 %v167
    %v465 = vunpack.c.h.b16 %v167
    %v466 = vunpack.c.l.b16 %v168
    %v467 = vunpack.c.l.b16 %v169
    %v468 = vunpack.c.h.b16 %v169
    %v469 = vunpack.c.l.b16 %v170
    %v470 = vunpack.c.l.b16 %v171
    %v471 = vunpack.c.h.b16 %v171
    %v472 = vunpack.c.l.b16 %v172
    %v473 = vunpack.c.l.b16 %v173
    %v474 = vunpack.c.h.b16 %v173
    %v475 = vunpack.c.l.b16 %v174
    %v476 = vunpack.c.l.b16 %v175
    %v477 = vunpack.c.h.b16 %v175
    %v478 = vunpack.c.l.b16 %v176
    %v479 = vunpack.c.l.b16 %v177
    %v480 = vunpack.c.h.b16 %v177
    %v481 = vunpack.c.l.b16 %v178
    %v482 = vunpack.c.l.b16 %v179
    %v483 = vunpack.c.h.b16 %v179
    %v484 = vunpack.c.l.b16 %v180
    %v485 = vunpack.c.l.b16 %v181
    %v486 = vunpack.c.h.b16 %v181
    %v487 = vunpack.c.l.b16 %v182
    %v488 = vunpack.c.l.b16 %v183
    %v489 = vunpack.c.h.b16 %v183
    %v490 = vunpack.c.l.b16 %v184
    %v491 = vunpack.c.l.b16 %v185
    %v492 = vunpack.c.h.b16 %v185
    %v493 = vunpack.c.l.b16 %v186
    %v494 = vunpack.c.l.b16 %v187
    %v495 = vunpack.c.h.b16 %v187
    %v496 = vunpack.c.l.b16 %v188
    %v497 = vunpack.c.l.b16 %v189
    %v498 = vunpack.c.h.b16 %v189
    %v499 = vunpack.c.l.b16 %v190
    %v500 = vunpack.c.l.b16 %v191
    %v501 = vunpack.c.h.b16 %v191
    %v502 = vunpack.c.l.b16 %v192
    %v503 = vunpack.c.l.b16 %v193
    %v504 = vunpack.c.h.b16 %v193
    %v505 = vunpack.c.l.b16 %v194
    %v506 = vunpack.c.l.b16 %v195
    %v507 = vunpack.c.h.b16 %v195
    %v508 = vunpack.c.l.b16 %v196
    %v509 = vunpack.c.l.b16 %v197
    %v510 = vunpack.c.h.b16 %v197
    %v511 = vunpack.c.l.b16 %v198
    %v512 = vunpack.c.l.b16 %v199
    %v513 = vunpack.c.h.b16 %v199
    %v514 = vunpack.c.l.b16 %v200
    %v515 = vunpack.c.l.b16 %v201
    %v516 = vunpack.c.h.b16 %v201
    %v517 = vunpack.c.l.b16 %v202
    %v518 = vunpack.c.l.b16 %v203
    %v519 = vunpack.c.h.b16 %v203
    %v520 = vunpack.c.l.b16 %v204
    %v521 = vunpack.c.l.b16 %v205
    %v522 = vunpack.c.h.b16 %v205
    %v523 = vunpack.c.l.b16 %v206
    %v524 = vunpack.c.l.b16 %v207
    %v525 = vunpack.c.h.b16 %v207
    %v526 = vunpack.c.l.b16 %v208
    %v527 = vunpack.c.l.b16 %v209
    %v528 = vunpack.c.h.b16 %v209
    %v529 = vunpack.c.l.b16 %v210
    %v530 = vunpack.c.l.b16 %v211
    %v531 = vunpack.c.h.b16 %v211
    %v532 = vunpack.c.l.b16 %v212
    %v533 = vunpack.c.l.b16 %v213
    %v534 = vunpack.c.h.b16 %v213
    %v535 = vunpack.c.l.b16 %v214
    %v536 = vunpack.c.l.b16 %v215
    %v537 = vunpack.c.h.b16 %v215
    %v538 = vunpack.c.l.b16 %v216
    %v539 = vunpack.c.l.b16 %v217
    %v540 = vunpack.c.h.b16 %v217
    %v541 = vunpack.c.l.b16 %v218
    %v542 = vunpack.c.l.b16 %v219
    %v543 = vunpack.c.h.b16 %v219
    %v544 = vunpack.c.l.b16 %v220
    %v545 = vunpack.c.l.b16 %v221
    %v546 = vunpack.c.h.b16 %v221
    %v547 = vunpack.c.l.b16 %v222
    %v548 = vunpack.c.l.b16 %v223
    %v549 = vunpack.c.h.b16 %v223
    %v550 = vunpack.c.l.b16 %v224
    %v551 = vunpack.c.l.b16 %v225
    %v552 = vunpack.c.h.b16 %v225
    %v553 = vunpack.c.l.b16 %v226
    %v554 = vunpack.c.l.b16 %v227
    %v555 = vunpack.c.h.b16 %v227
    %v556 = vunpack.c.l.b16 %v228
    %v557 = vpack.c.b16 %v368, %v365
    %v558 = vpack.c.b16 %v369, %v366
    %v559 = vpack.c.b16 %v370, %v367
    %v560 = vpack.c.b16 %v374, %v371
    %v561 = vpack.c.b16 %v375, %v372
    %v562 = vpack.c.b16 %v376, %v373
    %v563 = vpack.c.b16 %v380, %v377
    %v564 = vpack.c.b16 %v381, %v378
    %v565 = vpack.c.b16 %v382, %v379
    %v566 = vpack.c.b16 %v386, %v383
    %v567 = vpack.c.b16 %v387, %v384
    %v568 = vpack.c.b16 %v388, %v385
    %v569 = vpack.c.b16 %v392, %v389
    %v570 = vpack.c.b16 %v393, %v390
    %v571 = vpack.c.b16 %v394, %v391
    %v572 = vpack.c.b16 %v398, %v395
    %v573 = vpack.c.b16 %v399, %v396
    %v574 = vpack.c.b16 %v400, %v397
    %v575 = vpack.c.b16 %v404, %v401
    %v576 = vpack.c.b16 %v405, %v402
    %v577 = vpack.c.b16 %v406, %v403
    %v578 = vpack.c.b16 %v410, %v407
    %v579 = vpack.c.b16 %v411, %v408
    %v580 = vpack.c.b16 %v412, %v409
    %v581 = vpack.c.b16 %v416, %v413
    %v582 = vpack.c.b16 %v417, %v414
    %v583 = vpack.c.b16 %v418, %v415
    %v584 = vpack.c.b16 %v422, %v419
    %v585 = vpack.c.b16 %v423, %v420
    %v586 = vpack.c.b16 %v424, %v421
    %v587 = vpack.c.b16 %v428, %v425
    %v588 = vpack.c.b16 %v429, %v426
    %v589 = vpack.c.b16 %v430, %v427
    %v590 = vpack.c.b16 %v434, %v431
    %v591 = vpack.c.b16 %v435, %v432
    %v592 = vpack.c.b16 %v436, %v433
    %v593 = vpack.c.b16 %v440, %v437
    %v594 = vpack.c.b16 %v441, %v438
    %v595 = vpack.c.b16 %v442, %v439
    %v596 = vpack.c.b16 %v446, %v443
    %v597 = vpack.c.b16 %v447, %v444
    %v598 = vpack.c.b16 %v448, %v445
    %v599 = vpack.c.b16 %v452, %v449
    %v600 = vpack.c.b16 %v453, %v450
    %v601 = vpack.c.b16 %v454, %v451
    %v602 = vpack.c.b16 %v458, %v455
    %v603 = vpack.c.b16 %v459, %v456
    %v604 = vpack.c.b16 %v460, %v457
    %v605 = vpack.c.b16 %v464, %v461
    %v606 = vpack.c.b16 %v465, %v462
    %v607 = vpack.c.b16 %v466, %v463
    %v608 = vpack.c.b16 %v470, %v467
    %v609 = vpack.c.b16 %v471, %v468
    %v610 = vpack.c.b16 %v472, %v469
    %v611 = vpack.c.b16 %v476, %v473
    %v612 = vpack.c.b16 %v477, %v474
    %v613 = vpack.c.b16 %v478, %v475
    %v614 = vpack.c.b16 %v482, %v479
    %v615 = vpack.c.b16 %v483, %v480
    %v616 = vpack.c.b16 %v484, %v481
    %v617 = vpack.c.b16 %v488, %v485
    %v618 = vpack.c.b16 %v489, %v486
    %v619 = vpack.c.b16 %v490, %v487
    %v620 = vpack.c.b16 %v494, %v491
    %v621 = vpack.c.b16 %v495, %v492
    %v622 = vpack.c.b16 %v496, %v493
    %v623 = vpack.c.b16 %v500, %v497
    %v624 = vpack.c.b16 %v501, %v498
    %v625 = vpack.c.b16 %v502, %v499
    %v626 = vpack.c.b16 %v506, %v503
    %v627 = vpack.c.b16 %v507, %v504
    %v628 = vpack.c.b16 %v508, %v505
    %v629 = vpack.c.b16 %v512, %v509
    %v630 = vpack.c.b16 %v513, %v510
    %v631 = vpack.c.b16 %v514, %v511
    %v632 = vpack.c.b16 %v518, %v515
    %v633 = vpack.c.b16 %v519, %v516
    %v634 = vpack.c.b16 %v520, %v517
    %v635 = vpack.c.b16 %v524, %v521
    %v636 = vpack.c.b16 %v525, %v522
    %v637 = vpack.c.b16 %v526, %v523
    %v638 = vpack.c.b16 %v530, %v527
    %v639 = vpack.c.b16 %v531, %v528
    %v640 = vpack.c.b16 %v532, %v529
    %v641 = vpack.c.b16 %v536, %v533
    %v642 = vpack.c.b16 %v537, %v534
    %v643 = vpack.c.b16 %v538, %v535
    %v644 = vpack.c.b16 %v542, %v539
    %v645 = vpack.c.b16 %v543, %v540
    %v646 = vpack.c.b16 %v544, %v541
    %v647 = vpack.c.b16 %v548, %v545
    %v648 = vpack.c.b16 %v549, %v546
    %v649 = vpack.c.b16 %v550, %v547
    %v650 = vpack.c.b16 %v554, %v551
    %v651 = vpack.c.b16 %v555, %v552
    %v652 = vpack.c.b16 %v556, %v553
    %749 = vmatpush.bf16.msra.mxu0 %v578
    %750 = vmatpush.bf16.msra.mxu0 %v575
    %751 = vmatpush.bf16.msra.mxu0 %v572
    %752 = vmatpush.bf16.msra.mxu0 %v569
    %753 = vmatpush.bf16.msra.mxu0 %v566
    %754 = vmatpush.bf16.msra.mxu0 %v563
    %755 = vmatpush.bf16.msra.mxu0 %v560
    %756 = vmatpush.bf16.msra.mxu0 %v557
    %757 = vmatmul.bf16.gmra.mxu0 %v97
    %v758 = vpop.f32.mrf.mxu0
    %v759 = vadd.f32 %v231, %v758
    %v760 = vpop.f32.mrf.mxu0
    %v761 = vadd.f32 %v231, %v760
    %762 = vdwg.mxu0
    %763 = vmatpush.bf16.msra.mxu0 %v602
    %764 = vmatpush.bf16.msra.mxu0 %v599
    %765 = vmatpush.bf16.msra.mxu0 %v596
    %766 = vmatpush.bf16.msra.mxu0 %v593
    %767 = vmatpush.bf16.msra.mxu0 %v590
    %768 = vmatpush.bf16.msra.mxu0 %v587
    %769 = vmatpush.bf16.msra.mxu0 %v584
    %770 = vmatpush.bf16.msra.mxu0 %v581
    %771 = vmatmul.bf16.gmra.mxu0 %v98
    %v772 = vpop.f32.mrf.mxu0
    %v773 = vadd.f32 %v759, %v772
    %v774 = vpop.f32.mrf.mxu0
    %v775 = vadd.f32 %v761, %v774
    %776 = vdwg.mxu0
    %777 = vmatpush.bf16.msra.mxu0 %v626
    %778 = vmatpush.bf16.msra.mxu0 %v623
    %779 = vmatpush.bf16.msra.mxu0 %v620
    %780 = vmatpush.bf16.msra.mxu0 %v617
    %781 = vmatpush.bf16.msra.mxu0 %v614
    %782 = vmatpush.bf16.msra.mxu0 %v611
    %783 = vmatpush.bf16.msra.mxu0 %v608
    %784 = vmatpush.bf16.msra.mxu0 %v605
    %785 = vmatmul.bf16.gmra.mxu0 %v99
    %v786 = vpop.f32.mrf.mxu0
    %v787 = vadd.f32 %v773, %v786
    %v788 = vpop.f32.mrf.mxu0
    %v789 = vadd.f32 %v775, %v788
    %790 = vdwg.mxu0
    %791 = vmatpush.bf16.msra.mxu0 %v650
    %792 = vmatpush.bf16.msra.mxu0 %v647
    %793 = vmatpush.bf16.msra.mxu0 %v644
    %794 = vmatpush.bf16.msra.mxu0 %v641
    %795 = vmatpush.bf16.msra.mxu0 %v638
    %796 = vmatpush.bf16.msra.mxu0 %v635
    %797 = vmatpush.bf16.msra.mxu0 %v632
    %798 = vmatpush.bf16.msra.mxu0 %v629
    %799 = vmatmul.bf16.gmra.mxu0 %v100
    %v800 = vpop.f32.mrf.mxu0
    %v801 = vadd.f32 %v787, %v800
    %v802 = vpop.f32.mrf.mxu0
    %v803 = vadd.f32 %v789, %v802
    %804 = vdwg.mxu0
    %805 = vmatpush.bf16.msra.mxu0 %v579
    %806 = vmatpush.bf16.msra.mxu0 %v576
    %807 = vmatpush.bf16.msra.mxu0 %v573
    %808 = vmatpush.bf16.msra.mxu0 %v570
    %809 = vmatpush.bf16.msra.mxu0 %v567
    %810 = vmatpush.bf16.msra.mxu0 %v564
    %811 = vmatpush.bf16.msra.mxu0 %v561
    %812 = vmatpush.bf16.msra.mxu0 %v558
    %813 = vmatmul.bf16.gmra.mxu0 %v97
    %v814 = vpop.f32.mrf.mxu0
    %v815 = vadd.f32 %v232, %v814
    %v816 = vpop.f32.mrf.mxu0
    %v817 = vadd.f32 %v232, %v816
    %818 = vdwg.mxu0
    %819 = vmatpush.bf16.msra.mxu0 %v603
    %820 = vmatpush.bf16.msra.mxu0 %v600
    %821 = vmatpush.bf16.msra.mxu0 %v597
    %822 = vmatpush.bf16.msra.mxu0 %v594
    %823 = vmatpush.bf16.msra.mxu0 %v591
    %824 = vmatpush.bf16.msra.mxu0 %v588
    %825 = vmatpush.bf16.msra.mxu0 %v585
    %826 = vmatpush.bf16.msra.mxu0 %v582
    %827 = vmatmul.bf16.gmra.mxu0 %v98
    %v828 = vpop.f32.mrf.mxu0
    %v829 = vadd.f32 %v815, %v828
    %v830 = vpop.f32.mrf.mxu0
    %v831 = vadd.f32 %v817, %v830
    %832 = vdwg.mxu0
    %833 = vmatpush.bf16.msra.mxu0 %v627
    %834 = vmatpush.bf16.msra.mxu0 %v624
    %835 = vmatpush.bf16.msra.mxu0 %v621
    %836 = vmatpush.bf16.msra.mxu0 %v618
    %837 = vmatpush.bf16.msra.mxu0 %v615
    %838 = vmatpush.bf16.msra.mxu0 %v612
    %839 = vmatpush.bf16.msra.mxu0 %v609
    %840 = vmatpush.bf16.msra.mxu0 %v606
    %841 = vmatmul.bf16.gmra.mxu0 %v99
    %v842 = vpop.f32.mrf.mxu0
    %v843 = vadd.f32 %v829, %v842
    %v844 = vpop.f32.mrf.mxu0
    %v845 = vadd.f32 %v831, %v844
    %846 = vdwg.mxu0
    %847 = vmatpush.bf16.msra.mxu0 %v651
    %848 = vmatpush.bf16.msra.mxu0 %v648
    %849 = vmatpush.bf16.msra.mxu0 %v645
    %850 = vmatpush.bf16.msra.mxu0 %v642
    %851 = vmatpush.bf16.msra.mxu0 %v639
    %852 = vmatpush.bf16.msra.mxu0 %v636
    %853 = vmatpush.bf16.msra.mxu0 %v633
    %854 = vmatpush.bf16.msra.mxu0 %v630
    %855 = vmatmul.bf16.gmra.mxu0 %v100
    %v856 = vpop.f32.mrf.mxu0
    %v857 = vadd.f32 %v843, %v856
    %v858 = vpop.f32.mrf.mxu0
    %v859 = vadd.f32 %v845, %v858
    %860 = vdwg.mxu0
    %861 = vmatpush.bf16.msra.mxu0 %v580
    %862 = vmatpush.bf16.msra.mxu0 %v577
    %863 = vmatpush.bf16.msra.mxu0 %v574
    %864 = vmatpush.bf16.msra.mxu0 %v571
    %865 = vmatpush.bf16.msra.mxu0 %v568
    %866 = vmatpush.bf16.msra.mxu0 %v565
    %867 = vmatpush.bf16.msra.mxu0 %v562
    %868 = vmatpush.bf16.msra.mxu0 %v559
    %869 = vmatmul.bf16.gmra.mxu0 %v97
    %v870 = vpop.f32.mrf.mxu0
    %v871 = vadd.f32 %v233, %v870
    %v872 = vpop.f32.mrf.mxu0
    %v873 = vadd.f32 %v233, %v872
    %874 = vdwg.mxu0
    %875 = vmatpush.bf16.msra.mxu0 %v604
    %876 = vmatpush.bf16.msra.mxu0 %v601
    %877 = vmatpush.bf16.msra.mxu0 %v598
    %878 = vmatpush.bf16.msra.mxu0 %v595
    %879 = vmatpush.bf16.msra.mxu0 %v592
    %880 = vmatpush.bf16.msra.mxu0 %v589
    %881 = vmatpush.bf16.msra.mxu0 %v586
    %882 = vmatpush.bf16.msra.mxu0 %v583
    %883 = vmatmul.bf16.gmra.mxu0 %v98
    %v884 = vpop.f32.mrf.mxu0
    %v885 = vadd.f32 %v871, %v884
    %v886 = vpop.f32.mrf.mxu0
    %v887 = vadd.f32 %v873, %v886
    %888 = vdwg.mxu0
    %889 = vmatpush.bf16.msra.mxu0 %v628
    %890 = vmatpush.bf16.msra.mxu0 %v625
    %891 = vmatpush.bf16.msra.mxu0 %v622
    %892 = vmatpush.bf16.msra.mxu0 %v619
    %893 = vmatpush.bf16.msra.mxu0 %v616
    %894 = vmatpush.bf16.msra.mxu0 %v613
    %895 = vmatpush.bf16.msra.mxu0 %v610
    %896 = vmatpush.bf16.msra.mxu0 %v607
    %897 = vmatmul.bf16.gmra.mxu0 %v99
    %v898 = vpop.f32.mrf.mxu0
    %v899 = vadd.f32 %v885, %v898
    %v900 = vpop.f32.mrf.mxu0
    %v901 = vadd.f32 %v887, %v900
    %902 = vdwg.mxu0
    %903 = vmatpush.bf16.msra.mxu0 %v652
    %904 = vmatpush.bf16.msra.mxu0 %v649
    %905 = vmatpush.bf16.msra.mxu0 %v646
    %906 = vmatpush.bf16.msra.mxu0 %v643
    %907 = vmatpush.bf16.msra.mxu0 %v640
    %908 = vmatpush.bf16.msra.mxu0 %v637
    %909 = vmatpush.bf16.msra.mxu0 %v634
    %910 = vmatpush.bf16.msra.mxu0 %v631
    %911 = vmatmul.bf16.gmra.mxu0 %v100
    %v912 = vpop.f32.mrf.mxu0
    %v913 = vadd.f32 %v899, %v912
    %v914 = vpop.f32.mrf.mxu0
    %v915 = vadd.f32 %v901, %v914
    %916 = vdwg.mxu0
    %v917 = vmul.f32 %v801, 0.5
    %v918 = vmul.f32 %v803, 0.5
    %v919 = vtanh.pop %v917
    %v920 = vtanh.pop %v918
    %v921 = vmul.f32 %v919, 0.5
    %v922 = vmul.f32 %v920, 0.5
    %v923 = vadd.f32 %v921, 0.5
    %v924 = vadd.f32 %v922, 0.5
    %v925 = vtanh.pop %v857
    %v926 = vtanh.pop %v859
    %v927 = vmul.f32 %v913, 0.5
    %v928 = vmul.f32 %v915, 0.5
    %v929 = vtanh.pop %v927
    %v930 = vtanh.pop %v928
    %v931 = vmul.f32 %v929, 0.5
    %v932 = vmul.f32 %v930, 0.5
    %v933 = vadd.f32 %v931, 0.5
    %v934 = vadd.f32 %v932, 0.5
    %v935 = vmul.f32 %v923, %v925
    %v936 = vmul.f32 %v924, %v926
    %v937 = vtanh.pop %v935
    %v938 = vtanh.pop %v936
    %v939 = vmul.f32 %v933, %v937
    %v940 = vmul.f32 %v934, %v938
    %v941 = vpack.c.bf16 %v940, %v939
    %v942 = vld [vmem:[#allocation8] sm:$0xff]
    %v943 = vld [vmem:[#allocation8 + $0x8] sm:$0xf]
    %v944 = vld [vmem:[#allocation8 + $0xc] sm:$0xff]
    %v945 = vld [vmem:[#allocation8 + $0x14] sm:$0xf]
    %v946 = vld [vmem:[#allocation8 + $0x18] sm:$0xff]
    %v947 = vld [vmem:[#allocation8 + $0x20] sm:$0xf]
    %v948 = vld [vmem:[#allocation8 + $0x24] sm:$0xff]
    %v949 = vld [vmem:[#allocation8 + $0x2c] sm:$0xf]
    %v950 = vld [vmem:[#allocation8 + $0x30] sm:$0xff]
    %v951 = vld [vmem:[#allocation8 + $0x38] sm:$0xf]
    %v952 = vld [vmem:[#allocation8 + $0x3c] sm:$0xff]
    %v953 = vld [vmem:[#allocation8 + $0x44] sm:$0xf]
    %v954 = vld [vmem:[#allocation8 + $0x48] sm:$0xff]
    %v955 = vld [vmem:[#allocation8 + $0x50] sm:$0xf]
    %v956 = vld [vmem:[#allocation8 + $0x54] sm:$0xff]
    %v957 = vld [vmem:[#allocation8 + $0x5c] sm:$0xf]
    %v958 = vld [vmem:[#allocation8 + $0x60] sm:$0xff]
    %v959 = vld [vmem:[#allocation8 + $0x68] sm:$0xf]
    %v960 = vld [vmem:[#allocation8 + $0x6c] sm:$0xff]
    %v961 = vld [vmem:[#allocation8 + $0x74] sm:$0xf]
    %v962 = vld [vmem:[#allocation8 + $0x78] sm:$0xff]
    %v963 = vld [vmem:[#allocation8 + $0x80] sm:$0xf]
    %v964 = vld [vmem:[#allocation8 + $0x84] sm:$0xff]
    %v965 = vld [vmem:[#allocation8 + $0x8c] sm:$0xf]
    %v966 = vld [vmem:[#allocation8 + $0x90] sm:$0xff]
    %v967 = vld [vmem:[#allocation8 + $0x98] sm:$0xf]
    %v968 = vld [vmem:[#allocation8 + $0x9c] sm:$0xff]
    %v969 = vld [vmem:[#allocation8 + $0xa4] sm:$0xf]
    %v970 = vld [vmem:[#allocation8 + $0xa8] sm:$0xff]
    %v971 = vld [vmem:[#allocation8 + $0xb0] sm:$0xf]
    %v972 = vld [vmem:[#allocation8 + $0xb4] sm:$0xff]
    %v973 = vld [vmem:[#allocation8 + $0xbc] sm:$0xf]
    %v974 = vld [vmem:[#allocation9] sm:$0x7]
    %v976 = vperm.slane %v974, 0
    %v977 = vperm.slane %v974, 1
    %v978 = vperm.slane %v974, 2
    %v1014 = vunpack.c.l.b16 %v942
    %v1015 = vunpack.c.h.b16 %v942
    %v1016 = vunpack.c.l.b16 %v943
    %v1017 = vunpack.c.l.b16 %v944
    %v1018 = vunpack.c.h.b16 %v944
    %v1019 = vunpack.c.l.b16 %v945
    %v1020 = vunpack.c.l.b16 %v946
    %v1021 = vunpack.c.h.b16 %v946
    %v1022 = vunpack.c.l.b16 %v947
    %v1023 = vunpack.c.l.b16 %v948
    %v1024 = vunpack.c.h.b16 %v948
    %v1025 = vunpack.c.l.b16 %v949
    %v1026 = vunpack.c.l.b16 %v950
    %v1027 = vunpack.c.h.b16 %v950
    %v1028 = vunpack.c.l.b16 %v951
    %v1029 = vunpack.c.l.b16 %v952
    %v1030 = vunpack.c.h.b16 %v952
    %v1031 = vunpack.c.l.b16 %v953
    %v1032 = vunpack.c.l.b16 %v954
    %v1033 = vunpack.c.h.b16 %v954
    %v1034 = vunpack.c.l.b16 %v955
    %v1035 = vunpack.c.l.b16 %v956
    %v1036 = vunpack.c.h.b16 %v956
    %v1037 = vunpack.c.l.b16 %v957
    %v1038 = vunpack.c.l.b16 %v958
    %v1039 = vunpack.c.h.b16 %v958
    %v1040 = vunpack.c.l.b16 %v959
    %v1041 = vunpack.c.l.b16 %v960
    %v1042 = vunpack.c.h.b16 %v960
    %v1043 = vunpack.c.l.b16 %v961
    %v1044 = vunpack.c.l.b16 %v962
    %v1045 = vunpack.c.h.b16 %v962
    %v1046 = vunpack.c.l.b16 %v963
    %v1047 = vunpack.c.l.b16 %v964
    %v1048 = vunpack.c.h.b16 %v964
    %v1049 = vunpack.c.l.b16 %v965
    %v1050 = vunpack.c.l.b16 %v966
    %v1051 = vunpack.c.h.b16 %v966
    %v1052 = vunpack.c.l.b16 %v967
    %v1053 = vunpack.c.l.b16 %v968
    %v1054 = vunpack.c.h.b16 %v968
    %v1055 = vunpack.c.l.b16 %v969
    %v1056 = vunpack.c.l.b16 %v970
    %v1057 = vunpack.c.h.b16 %v970
    %v1058 = vunpack.c.l.b16 %v971
    %v1059 = vunpack.c.l.b16 %v972
    %v1060 = vunpack.c.h.b16 %v972
    %v1061 = vunpack.c.l.b16 %v973
    %v1062 = vpack.c.b16 %v1017, %v1014
    %v1063 = vpack.c.b16 %v1018, %v1015
    %v1064 = vpack.c.b16 %v1019, %v1016
    %v1065 = vpack.c.b16 %v1023, %v1020
    %v1066 = vpack.c.b16 %v1024, %v1021
    %v1067 = vpack.c.b16 %v1025, %v1022
    %v1068 = vpack.c.b16 %v1029, %v1026
    %v1069 = vpack.c.b16 %v1030, %v1027
    %v1070 = vpack.c.b16 %v1031, %v1028
    %v1071 = vpack.c.b16 %v1035, %v1032
    %v1072 = vpack.c.b16 %v1036, %v1033
    %v1073 = vpack.c.b16 %v1037, %v1034
    %v1074 = vpack.c.b16 %v1041, %v1038
    %v1075 = vpack.c.b16 %v1042, %v1039
    %v1076 = vpack.c.b16 %v1043, %v1040
    %v1077 = vpack.c.b16 %v1047, %v1044
    %v1078 = vpack.c.b16 %v1048, %v1045
    %v1079 = vpack.c.b16 %v1049, %v1046
    %v1080 = vpack.c.b16 %v1053, %v1050
    %v1081 = vpack.c.b16 %v1054, %v1051
    %v1082 = vpack.c.b16 %v1055, %v1052
    %v1083 = vpack.c.b16 %v1059, %v1056
    %v1084 = vpack.c.b16 %v1060, %v1057
    %v1085 = vpack.c.b16 %v1061, %v1058
    %1110 = vmatpush.bf16.msra.mxu0 %v1083
    %1111 = vmatpush.bf16.msra.mxu0 %v1080
    %1112 = vmatpush.bf16.msra.mxu0 %v1077
    %1113 = vmatpush.bf16.msra.mxu0 %v1074
    %1114 = vmatpush.bf16.msra.mxu0 %v1071
    %1115 = vmatpush.bf16.msra.mxu0 %v1068
    %1116 = vmatpush.bf16.msra.mxu0 %v1065
    %1117 = vmatpush.bf16.msra.mxu0 %v1062
    %1118 = vmatmul.bf16.gmra.mxu0 %v941
    %v1119 = vpop.f32.mrf.mxu0
    %v1120 = vadd.f32 %v976, %v1119
    %v1121 = vpop.f32.mrf.mxu0
    %v1122 = vadd.f32 %v976, %v1121
    %1123 = vdwg.mxu0
    %1124 = vmatpush.bf16.msra.mxu0 %v1084
    %1125 = vmatpush.bf16.msra.mxu0 %v1081
    %1126 = vmatpush.bf16.msra.mxu0 %v1078
    %1127 = vmatpush.bf16.msra.mxu0 %v1075
    %1128 = vmatpush.bf16.msra.mxu0 %v1072
    %1129 = vmatpush.bf16.msra.mxu0 %v1069
    %1130 = vmatpush.bf16.msra.mxu0 %v1066
    %1131 = vmatpush.bf16.msra.mxu0 %v1063
    %1132 = vmatmul.bf16.gmra.mxu0 %v941
    %v1133 = vpop.f32.mrf.mxu0
    %v1134 = vadd.f32 %v977, %v1133
    %v1135 = vpop.f32.mrf.mxu0
    %v1136 = vadd.f32 %v977, %v1135
    %1137 = vdwg.mxu0
    %1138 = vmatpush.bf16.msra.mxu0 %v1085
    %1139 = vmatpush.bf16.msra.mxu0 %v1082
    %1140 = vmatpush.bf16.msra.mxu0 %v1079
    %1141 = vmatpush.bf16.msra.mxu0 %v1076
    %1142 = vmatpush.bf16.msra.mxu0 %v1073
    %1143 = vmatpush.bf16.msra.mxu0 %v1070
    %1144 = vmatpush.bf16.msra.mxu0 %v1067
    %1145 = vmatpush.bf16.msra.mxu0 %v1064
    %1146 = vmatmul.bf16.gmra.mxu0 %v941
    %v1147 = vpop.f32.mrf.mxu0
    %v1148 = vadd.f32 %v978, %v1147
    %v1149 = vpop.f32.mrf.mxu0
    %v1150 = vadd.f32 %v978, %v1149
    %1151 = vdwg.mxu0
    %v1152 = vmul.f32 %v1120, 0.5
    %v1153 = vmul.f32 %v1122, 0.5
    %v1154 = vtanh.pop %v1152
    %v1155 = vtanh.pop %v1153
    %v1156 = vmul.f32 %v1154, 0.5
    %v1157 = vmul.f32 %v1155, 0.5
    %v1158 = vadd.f32 %v1156, 0.5
    %v1159 = vadd.f32 %v1157, 0.5
    %v1160 = vtanh.pop %v1134
    %v1161 = vtanh.pop %v1136
    %v1162 = vmul.f32 %v1148, 0.5
    %v1163 = vmul.f32 %v1150, 0.5
    %v1164 = vtanh.pop %v1162
    %v1165 = vtanh.pop %v1163
    %v1166 = vmul.f32 %v1164, 0.5
    %v1167 = vmul.f32 %v1165, 0.5
    %v1168 = vadd.f32 %v1166, 0.5
    %v1169 = vadd.f32 %v1167, 0.5
    %v1170 = vmul.f32 %v1158, %v1160
    %v1171 = vmul.f32 %v1159, %v1161
    %v1172 = vtanh.pop %v1170
    %v1173 = vtanh.pop %v1171
    %v1174 = vmul.f32 %v1168, %v1172
    %v1175 = vmul.f32 %v1169, %v1173
    %v1176 = vld [vmem:[%s5] sm:$0x1]
    %v1178 = vperm.slane %v1176, 0
    %v1180 = vmul.f32 %v1174, %v1178
    %v1181 = vmul.f32 %v1175, %v1178
    %1182 = vxpose.xlu0.b32.start [1/16] %v1180, 128
    %1183 = vxpose.xlu0.b32.cont [2/16] %v1181, 128
    %1184 = vxpose.xlu0.b32.cont [3/16] 0.0, 128
    %1185 = vxpose.xlu0.b32.cont [4/16] 0.0, 128
    %1186 = vxpose.xlu0.b32.cont [5/16] 0.0, 128
    %1187 = vxpose.xlu0.b32.cont [6/16] 0.0, 128
    %1188 = vxpose.xlu0.b32.cont [7/16] 0.0, 128
    %1189 = vxpose.xlu0.b32.cont [8/16] 0.0, 128
    %1190 = vxpose.xlu0.b32.cont [9/16] 0.0, 128
    %1191 = vxpose.xlu0.b32.cont [10/16] 0.0, 128
    %1192 = vxpose.xlu0.b32.cont [11/16] 0.0, 128
    %1193 = vxpose.xlu0.b32.cont [12/16] 0.0, 128
    %1194 = vxpose.xlu0.b32.cont [13/16] 0.0, 128
    %1195 = vxpose.xlu0.b32.cont [14/16] 0.0, 128
    %1196 = vxpose.xlu0.b32.cont [15/16] 0.0, 128
    %1197 = vxpose.xlu0.b32.end [16/16] 0.0, 128
    %v1198 = vpop.trf.xlu0
    %v1199 = vpop.trf.xlu0
    %v1200 = vpop.trf.xlu0
    %v1201 = vpop.trf.xlu0
    %v1202 = vpop.trf.xlu0
    %v1203 = vpop.trf.xlu0
    %v1204 = vpop.trf.xlu0
    %v1205 = vpop.trf.xlu0
    %v1206 = vpop.trf.xlu0
    %v1207 = vpop.trf.xlu0
    %v1208 = vpop.trf.xlu0
    %v1209 = vpop.trf.xlu0
    %v1210 = vpop.trf.xlu0
    %v1211 = vpop.trf.xlu0
    %v1212 = vpop.trf.xlu0
    %v1213 = vpop.trf.xlu0
    %vm1214 = vcmask 130048
    %v1215 = vsel %vm1214, %v1198, 0.0
    %v1216 = vsel %vm1214, %v1199, 0.0
    %v1217 = vadd.f32 %v1215, %v1216
    %v1218 = vsel %vm1214, %v1200, 0.0
    %v1219 = vadd.f32 %v1217, %v1218
    %v1220 = vsel %vm1214, %v1201, 0.0
    %v1221 = vadd.f32 %v1219, %v1220
    %v1222 = vsel %vm1214, %v1202, 0.0
    %v1223 = vadd.f32 %v1221, %v1222
    %v1224 = vsel %vm1214, %v1203, 0.0
    %v1225 = vadd.f32 %v1223, %v1224
    %v1226 = vsel %vm1214, %v1204, 0.0
    %v1227 = vadd.f32 %v1225, %v1226
    %v1228 = vsel %vm1214, %v1205, 0.0
    %v1229 = vadd.f32 %v1227, %v1228
    %v1230 = vsel %vm1214, %v1206, 0.0
    %v1231 = vadd.f32 %v1229, %v1230
    %v1232 = vsel %vm1214, %v1207, 0.0
    %v1233 = vadd.f32 %v1231, %v1232
    %v1234 = vsel %vm1214, %v1208, 0.0
    %v1235 = vadd.f32 %v1233, %v1234
    %v1236 = vsel %vm1214, %v1209, 0.0
    %v1237 = vadd.f32 %v1235, %v1236
    %v1238 = vsel %vm1214, %v1210, 0.0
    %v1239 = vadd.f32 %v1237, %v1238
    %v1240 = vsel %vm1214, %v1211, 0.0
    %v1241 = vadd.f32 %v1239, %v1240
    %v1242 = vsel %vm1214, %v1212, 0.0
    %v1243 = vadd.f32 %v1241, %v1242
    %v1244 = vsel %vm1214, %v1213, 0.0
    %v1245 = vadd.f32 %v1243, %v1244
    %v1246 = vrot.slane %v1245, 4
    %v1247 = vadd.f32 %v1245, %v1246
    %v1248 = vrot.slane %v1247, 2
    %v1249 = vadd.f32 %v1247, %v1248
    %v1250 = vrot.slane %v1249, 1
    %v1251 = vadd.f32 %v1249, %v1250
    %s1252 = sld [smem:[#allocation2]]
    %v1253 = vstv %s1252
    %v1254 = vadd.f32 %v1251, %v1253
    %vm1255 = vcmask 122880
    %1256 = vst.msk [vmem:[#allocation11] sm:$0x1] %vm1255, %v1254
    // Predicated region
    $region46: #{tpu_custom_call.1} parent=1 // pred_check
      _
    $region47: #{tpu_custom_call.1} parent=1 // pred_check_branch
      %1258 = sbr.rel (0) target = $region49
    $region48: #{tpu_custom_call.1} parent=1 // pred_region
      %1260 = vsyncadd [#allocation5], 0
      %s1262 = sshll.u32 [#allocation11], 4
      %s1263 = int_to_ptr.vmem [resolvable:$true] %s1262
      %s1264 = sshll.u32 %s7, 4
      %s1265 = int_to_ptr.hbm [resolvable:$true] %s1264
      %1267 = dma.vmem_to_hbm [thread:$0]  %s1263, 16, %s1265, [#allocation5]
    $region49: #{tpu_custom_call.1} parent=1 // pred_fallthru
      _
    // Predicated region
    $region50: #{tpu_custom_call.1} parent=1 // pred_check
      _
    $region51: #{tpu_custom_call.1} parent=1 // pred_check_branch
      %1269 = sbr.rel (0) target = $region53
    $region52: #{tpu_custom_call.1} parent=1 // pred_region
      %1271 = dma.done [#allocation5], 16
    $region53: #{tpu_custom_call.1} parent=1 // pred_fallthru
      _
    %1272 = vsyncpa [#allocation4], 1
    %1273 = vsyncpa [#allocation7], 1
    %1274 = vsyncpa [#allocation10], 1
    %1275 = vsyncpa [#allocation5], 1

</llo_original>
